<compile_context>
chip_gen: v6e
topology: v6e:2x2x1
jax: 0.10.0
libtpu: 0.0.40
codegen_flags: <defaults>
</compile_context>

<pallas_src>
from functools import partial

import jax
import jax.numpy as jnp
from jax.experimental import pallas as pl
from jax.experimental.pallas import tpu as pltpu


def _pick_tile(n, cap):
    """Largest multiple of 8 that divides `n` and is <= cap."""
    best = 8
    for t in range(8, min(cap, n) + 1, 8):
        if n % t == 0:
            best = t
    return best


# ---------------------------------------------------------------------------
# Kernel 1: row-wise L2 normalization of q and k into a stacked (2, B, D) buf.
# ---------------------------------------------------------------------------
def _normalize_kernel(q_ref, k_ref, o_ref):
    q = q_ref[...].astype(jnp.float32)
    k = k_ref[...].astype(jnp.float32)
    # F.normalize(p=2, dim=1): x / max(||x||, 1e-12) == x * rsqrt(max(||x||^2, 1e-24))
    q_inv = jax.lax.rsqrt(jnp.maximum(jnp.sum(q * q, axis=1, keepdims=True), 1e-24))
    k_inv = jax.lax.rsqrt(jnp.maximum(jnp.sum(k * k, axis=1, keepdims=True), 1e-24))
    o_ref[0] = q * q_inv
    o_ref[1] = k * k_inv


# ---------------------------------------------------------------------------
# Kernel 2: tiled InfoNCE over the virtual (N x N) similarity matrix, N = 2B.
# ---------------------------------------------------------------------------
def _infonce_kernel(rows_ref, cols_ref, partner_ref, loss_ref, acc_ref,
                    *, inv_temp, tr, tc):
    i = pl.program_id(0)            # row-tile index  ("parallel")
    j = pl.program_id(1)            # col-tile index  ("arbitrary" / reduction)

    @pl.when(j == 0)
    def _init():
        acc_ref[...] = jnp.zeros_like(acc_ref)

    rows = rows_ref[...]            # [TR, D] unit-norm rows (f32)
    cols = cols_ref[...]            # [TC, D] unit-norm rows (f32)

    # sim tile = rows @ cols^T : contract the last dims of both operands so
    # the MXU is fed in its natural rhs-transposed form (no explicit .T).
    s = jax.lax.dot_general(rows, cols, (((1,), (1,)), ((), ())),
                            preferred_element_type=jnp.float32)     # [TR, TC]

    e = jnp.exp(s * inv_temp)                                       # [TR, TC]
    acc_ref[...] += jnp.sum(e, axis=1, keepdims=True)               # [TR, 1]

    # Remove self-similarity (diagonal) terms exactly — only on tiles that
    # actually intersect the diagonal.
    r0 = i * tr
    c0 = j * tc
    touches_diag = jnp.logical_and(r0 < c0 + tc, c0 < r0 + tr)

    @pl.when(touches_diag)
    def _drop_diag():
        rg = r0 + jax.lax.broadcasted_iota(jnp.int32, (tr, tc), 0)
        cg = c0 + jax.lax.broadcasted_iota(jnp.int32, (tr, tc), 1)
        diag = jnp.sum(jnp.where(rg == cg, e, 0.0), axis=1, keepdims=True)
        acc_ref[...] -= diag

    @pl.when(j == pl.num_programs(1) - 1)
    def _finalize():
        # positive-pair score: per-row dot with the partner half (row r pairs
        # with row (r + B) mod N).  O(TR*D) VPU work; no N x N masking.
        pos = jnp.sum(rows * partner_ref[...], axis=1, keepdims=True)  # [TR,1]
        # -log(exp(pos/T) / den) == log(den) - pos/T
        loss_ref[...] = jnp.log(acc_ref[...]) - pos * inv_temp


# ---------------------------------------------------------------------------
# Python wrapper
# ---------------------------------------------------------------------------
def infonce(q_feat, k_feat, temperature=0.1):
    """InfoNCE loss (reduction='mean') via tiled Pallas TPU kernels."""
    B, D = q_feat.shape
    assert k_feat.shape == (B, D)
    assert B % 8 == 0, "batch size must be a multiple of 8 (TPU sublane width)"

    N = 2 * B
    TR = _pick_tile(B, 128)       # row tile: divides B so each tile sits in one half
    TC = _pick_tile(N, 512)       # col tile: divides N
    n_row_tiles = N // TR
    n_col_tiles = N // TC
    half_shift = B // TR          # partner block offset (shift by B rows)

    # --- pass 1: normalize q, k into stacked (2, B, D) ----------------------
    stacked = pl.pallas_call(
        _normalize_kernel,
        out_shape=jax.ShapeDtypeStruct((2, B, D), jnp.float32),
        grid_spec=pltpu.PrefetchScalarGridSpec(
            num_scalar_prefetch=0,
            grid=(B // TR,),
            in_specs=[pl.BlockSpec((TR, D), lambda i: (i, 0)),
                      pl.BlockSpec((TR, D), lambda i: (i, 0))],
            out_specs=pl.BlockSpec((2, TR, D), lambda i: (0, i, 0)),
        ),
        compiler_params=pltpu.CompilerParams(dimension_semantics=("parallel",)),
    )(q_feat, k_feat)
    out_n = stacked.reshape(N, D)       # == concat([qn, kn], 0); contiguous reshape

    # --- pass 2: flash-style tiled similarity / loss ------------------------
    kern = partial(_infonce_kernel, inv_temp=1.0 / temperature, tr=TR, tc=TC)
    loss_rows = pl.pallas_call(
        kern,
        out_shape=jax.ShapeDtypeStruct((N, 1), jnp.float32),
        grid_spec=pltpu.PrefetchScalarGridSpec(
            num_scalar_prefetch=0,
            grid=(n_row_tiles, n_col_tiles),
            in_specs=[
                pl.BlockSpec((TR, D), lambda i, j: (i, 0)),            # row tile
                pl.BlockSpec((TC, D), lambda i, j: (j, 0)),            # col tile
                pl.BlockSpec((TR, D),                                  # partner rows
                             lambda i, j: ((i + half_shift) % n_row_tiles, 0)),
            ],
            out_specs=pl.BlockSpec((TR, 1), lambda i, j: (i, 0)),
            scratch_shapes=[pltpu.VMEM((TR, 1), jnp.float32)],
        ),
        compiler_params=pltpu.CompilerParams(
            dimension_semantics=("parallel", "arbitrary")),
    )(out_n, out_n, out_n)

    return jnp.sum(loss_rows) / N       # reduction='mean'


def infonce_ref(q_feat, k_feat, temperature=0.1):
    """Pure-JAX reference mirroring the PyTorch forward (for sanity check)."""
    q = q_feat.astype(jnp.float32)
    k = k_feat.astype(jnp.float32)
    qn = q / jnp.maximum(jnp.linalg.norm(q, axis=1, keepdims=True), 1e-12)
    kn = k / jnp.maximum(jnp.linalg.norm(k, axis=1, keepdims=True), 1e-12)
    B = q.shape[0]
    out = jnp.concatenate([qn, kn], axis=0)
    sim = out @ out.T
    pos = jnp.concatenate([jnp.diagonal(sim, B), jnp.diagonal(sim, -B)], axis=0)
    sim = sim - jnp.eye(2 * B, dtype=jnp.float32) * 1.0e12
    nom = jnp.exp(pos / temperature)
    den = jnp.sum(jnp.exp(sim / temperature), axis=1)
    return jnp.mean(-jnp.log(nom / den))


if __name__ == "__main__":
    batch, ndim = 8, 32
    key = jax.random.PRNGKey(0)
    kq, kk = jax.random.split(key)
    q_feat = jax.random.normal(kq, (batch, ndim), dtype=jnp.float32)
    k_feat = jax.random.normal(kk, (batch, ndim), dtype=jnp.float32)

    loss = infonce(q_feat, k_feat, temperature=0.1)
    loss = jax.block_until_ready(loss)

    ref = infonce_ref(q_feat, k_feat, temperature=0.1)
    assert jnp.allclose(loss, ref, atol=1e-4, rtol=1e-4), (loss, ref)

    print("KERNEL_OK")
</pallas_src>

<mosaic_0001>
module attributes {stable_mosaic.version = 11 : i64} {
  func.func @_normalize_kernel(%arg0: i32, %arg1: memref<8x32xf32, #tpu.memory_space<vmem>>, %arg2: memref<8x32xf32, #tpu.memory_space<vmem>>, %arg3: memref<2x8x32xf32, #tpu.memory_space<vmem>>) attributes {dimension_semantics = [#tpu.dimension_semantics<parallel>], iteration_bounds = array<i64: 1>, scalar_prefetch = 0 : i64, scratch_operands = 0 : i64, tpu.core_type = #tpu.core_type<tc>, window_params = [{transform_indices = @transform_0, window_bounds = array<i64: 8, 32>}, {transform_indices = @transform_1, window_bounds = array<i64: 8, 32>}, {transform_indices = @transform_2, window_bounds = array<i64: 2, 8, 32>}]} {
    %c0 = arith.constant 0 : index
    %c0_0 = arith.constant 0 : index
    %0 = vector.load %arg1[%c0, %c0_0] : memref<8x32xf32, #tpu.memory_space<vmem>>, vector<8x32xf32>
    %c0_1 = arith.constant 0 : index
    %c0_2 = arith.constant 0 : index
    %1 = vector.load %arg2[%c0_1, %c0_2] : memref<8x32xf32, #tpu.memory_space<vmem>>, vector<8x32xf32>
    %2 = arith.mulf %0, %0 : vector<8x32xf32>
    %cst = arith.constant dense<0.000000e+00> : vector<8xf32>
    %3 = vector.multi_reduction <add>, %2, %cst [1] : vector<8x32xf32> to vector<8xf32>
    %4 = vector.shape_cast %3 : vector<8xf32> to vector<8x1xf32>
    %cst_3 = arith.constant 1.000000e-24 : f32
    %5 = vector.broadcast %cst_3 : f32 to vector<8x1xf32>
    %6 = arith.maximumf %4, %5 : vector<8x1xf32>
    %7 = math.rsqrt %6 : vector<8x1xf32>
    %8 = arith.mulf %1, %1 : vector<8x32xf32>
    %cst_4 = arith.constant dense<0.000000e+00> : vector<8xf32>
    %9 = vector.multi_reduction <add>, %8, %cst_4 [1] : vector<8x32xf32> to vector<8xf32>
    %10 = vector.shape_cast %9 : vector<8xf32> to vector<8x1xf32>
    %cst_5 = arith.constant 1.000000e-24 : f32
    %11 = vector.broadcast %cst_5 : f32 to vector<8x1xf32>
    %12 = arith.maximumf %10, %11 : vector<8x1xf32>
    %13 = math.rsqrt %12 : vector<8x1xf32>
    %14 = vector.broadcast %7 : vector<8x1xf32> to vector<8x32xf32>
    %15 = arith.mulf %0, %14 : vector<8x32xf32>
    %c0_6 = arith.constant 0 : index
    %c0_7 = arith.constant 0 : index
    %c0_8 = arith.constant 0 : index
    %16 = vector.load %arg3[%c0_6, %c0_7, %c0_8] : memref<2x8x32xf32, #tpu.memory_space<vmem>>, vector<1x8x32xf32>
    %17 = vector.shape_cast %16 : vector<1x8x32xf32> to vector<8x32xf32>
    %18 = vector.shape_cast %15 : vector<8x32xf32> to vector<1x8x32xf32>
    tpu.vector_store %arg3[%c0_6, %c0_7, %c0_8], %18 {strides = array<i32>} : memref<2x8x32xf32, #tpu.memory_space<vmem>>, vector<1x8x32xf32>,
    %19 = vector.broadcast %13 : vector<8x1xf32> to vector<8x32xf32>
    %20 = arith.mulf %1, %19 : vector<8x32xf32>
    %c1 = arith.constant 1 : index
    %c0_9 = arith.constant 0 : index
    %c0_10 = arith.constant 0 : index
    %21 = vector.load %arg3[%c1, %c0_9, %c0_10] : memref<2x8x32xf32, #tpu.memory_space<vmem>>, vector<1x8x32xf32>
    %22 = vector.shape_cast %21 : vector<1x8x32xf32> to vector<8x32xf32>
    %23 = vector.shape_cast %20 : vector<8x32xf32> to vector<1x8x32xf32>
    tpu.vector_store %arg3[%c1, %c0_9, %c0_10], %23 {strides = array<i32>} : memref<2x8x32xf32, #tpu.memory_space<vmem>>, vector<1x8x32xf32>,
    return
  }
  func.func @transform_0(%arg0: i32) -> (i32, i32) {
    %c0_i32 = arith.constant 0 : i32
    %c0_i32_0 = arith.constant 0 : i32
    return %arg0, %c0_i32 : i32, i32
  }
  func.func @transform_1(%arg0: i32) -> (i32, i32) {
    %c0_i32 = arith.constant 0 : i32
    %c0_i32_0 = arith.constant 0 : i32
    return %arg0, %c0_i32 : i32, i32
  }
  func.func @transform_2(%arg0: i32) -> (i32, i32, i32) {
    %c0_i32 = arith.constant 0 : i32
    %c0_i32_0 = arith.constant 0 : i32
    %c0_i32_1 = arith.constant 0 : i32
    return %c0_i32, %arg0, %c0_i32_0 : i32, i32, i32
  }
}

</mosaic_0001>

<llo_original>
// kernel: tpu_custom_call.1
$region0: #{tpu_custom_call.1}
  #allocation0 [shape = 'u32[]', space=smem, size = 0x4, offset = 0x4, fixed_abs, tag = 'smem constant byte address 0x4 - core index']
  #allocation1 [shape = 'u32[144,128]{1,0:T(1,128)}', space=vmem, size = 0x12000, scoped, tag = 'internal scratch']
  %s0 = inlined_call_operand.hbm [shape: f32[8,32], index: 0, kind: input, shape index: {}]
  %s1 = inlined_call_operand.hbm [shape: f32[8,32], index: 1, kind: input, shape index: {}]
  %s2 = inlined_call_operand.hbm [shape: f32[2,8,32], index: 2, kind: output, shape index: {}]
  %s3 = sld [smem:[#allocation0]]
  $region26: #{tpu_custom_call.1} parent=0
    _
  %s5 = ssub.s32 1, %s3
  %s6 = scalar_select 0, %s5, %s3
  $region1: #{tpu_custom_call.1} parent=0
    #allocation2 [shape = 'u8[4096]{0}', space=vmem, size = 0x1000, scoped, tag = 'input window, operand 0, single buffered']
    #allocation3 [shape = 's32[1]{0}', space=sflag, size = 0x4, scoped, tag = 'scoped memory for tpu_custom_call.1']
    #allocation4 [shape = 's32[1]{0}', space=sflag, size = 0x4, scoped, tag = 'scoped memory for tpu_custom_call.1']
    #allocation5 [shape = 'u8[4096]{0}', space=vmem, size = 0x1000, scoped, tag = 'input window, operand 1, single buffered']
    #allocation6 [shape = 's32[1]{0}', space=sflag, size = 0x4, scoped, tag = 'scoped memory for tpu_custom_call.1']
    #allocation7 [shape = 'u8[8192]{0}', space=vmem, size = 0x2000, scoped, tag = 'output window, operand 0, single buffered']
    %7 = vsyncpa [#allocation3], 0
    %8 = vsyncpa [#allocation6], 0
    %9 = vsyncpa [#allocation4], 0
    // Predicated region
    $region2: #{tpu_custom_call.1} parent=1 // pred_check
      _
    $region3: #{tpu_custom_call.1} parent=1 // pred_check_branch
      %11 = sbr.rel (0) target = $region5
    $region4: #{tpu_custom_call.1} parent=1 // pred_region
      %s13 = ssub.s32 128, 128
      %14 = vsyncadd [#allocation3], %s13
      %s16 = sshll.u32 [#allocation2], 4
      %s17 = int_to_ptr.vmem [resolvable:$true] %s16
      %19 = dma.hbm_to_vmem [thread:$0]  %s0, 128, %s17, [#allocation3]
    $region5: #{tpu_custom_call.1} parent=1 // pred_fallthru
      _
    // Predicated region
    $region6: #{tpu_custom_call.1} parent=1 // pred_check
      _
    $region7: #{tpu_custom_call.1} parent=1 // pred_check_branch
      %21 = sbr.rel (0) target = $region9
    $region8: #{tpu_custom_call.1} parent=1 // pred_region
      %s23 = ssub.s32 128, 128
      %24 = vsyncadd [#allocation6], %s23
      %s26 = sshll.u32 [#allocation5], 4
      %s27 = int_to_ptr.vmem [resolvable:$true] %s26
      %29 = dma.hbm_to_vmem [thread:$0]  %s1, 128, %s27, [#allocation6]
    $region9: #{tpu_custom_call.1} parent=1 // pred_fallthru
      _
    // Predicated region
    $region10: #{tpu_custom_call.1} parent=1 // pred_check
      _
    $region11: #{tpu_custom_call.1} parent=1 // pred_check_branch
      %31 = sbr.rel (0) target = $region13
    $region12: #{tpu_custom_call.1} parent=1 // pred_region
      %32 = dma.done [#allocation3], 128
    $region13: #{tpu_custom_call.1} parent=1 // pred_fallthru
      _
    // Predicated region
    $region14: #{tpu_custom_call.1} parent=1 // pred_check
      _
    $region15: #{tpu_custom_call.1} parent=1 // pred_check_branch
      %34 = sbr.rel (0) target = $region17
    $region16: #{tpu_custom_call.1} parent=1 // pred_region
      %35 = dma.done [#allocation6], 128
    $region17: #{tpu_custom_call.1} parent=1 // pred_fallthru
      _
    %v36 = vld [vmem:[#allocation2] sm:$0xff]
    %v37 = vld [vmem:[#allocation5] sm:$0xff]
    %v38 = vmul.f32 %v36, %v36
    %vm39 = vcmask 261120
    %v40 = vsel %vm39, %v38, 0.0
    %41 = vadd.xlane.f32.xlu0 %v40
    %v42 = vpop.xlane.xlu0 %41
    %v43 = vmax.f32 %v42, 1e-24
    %v44 = vrsqrt.pop %v43
    %v45 = vmul.f32 %v37, %v37
    %v46 = vsel %vm39, %v45, 0.0
    %47 = vadd.xlane.f32.xlu0 %v46
    %v48 = vpop.xlane.xlu0 %47
    %v49 = vmax.f32 %v48, 1e-24
    %v50 = vrsqrt.pop %v49
    %v51 = vmul.f32 %v36, %v44
    %52 = vst.msk [vmem:[#allocation7] sm:$0xff] %vm39, %v51
    %v53 = vmul.f32 %v37, %v50
    %s54 = scalar_lea.vmem [#allocation7], 8
    %55 = vst.msk [vmem:[%s54] sm:$0xff] %vm39, %v53
    // Predicated region
    $region18: #{tpu_custom_call.1} parent=1 // pred_check
      _
    $region19: #{tpu_custom_call.1} parent=1 // pred_check_branch
      %57 = sbr.rel (0) target = $region21
    $region20: #{tpu_custom_call.1} parent=1 // pred_region
      %s59 = ssub.s32 256, 256
      %60 = vsyncadd [#allocation4], %s59
      %s61 = sshll.u32 [#allocation7], 4
      %s62 = int_to_ptr.vmem [resolvable:$true] %s61
      %67 = dma.vmem_to_hbm [thread:$0]  %s62, 256, %s2, [#allocation4], 128, 128, 8
    $region21: #{tpu_custom_call.1} parent=1 // pred_fallthru
      _
    // Predicated region
    $region22: #{tpu_custom_call.1} parent=1 // pred_check
      _
    $region23: #{tpu_custom_call.1} parent=1 // pred_check_branch
      %69 = sbr.rel (0) target = $region25
    $region24: #{tpu_custom_call.1} parent=1 // pred_region
      %70 = dma.done [#allocation4], 256
    $region25: #{tpu_custom_call.1} parent=1 // pred_fallthru
      _
    %71 = vsyncpa [#allocation3], 1
    %72 = vsyncpa [#allocation6], 1
    %73 = vsyncpa [#allocation4], 1

</llo_original>
